<compile_context>
chip_gen: v5e
topology: v5e:2x2
jax: 0.10.0
libtpu: 0.0.40
codegen_flags: <defaults>
</compile_context>

<pallas_src>
import jax
import jax.numpy as jnp
from jax import lax
from jax.experimental import pallas as pl
from jax.experimental.pallas import tpu as pltpu

BN_EPS = 1e-5


def _make_kernel(C, T, L, K, dilation, compute_dtype):
    """Per-grid-step kernel: one (C, L) lane-block of the (C, B*T) layout."""

    def causal_conv(h, col, w, b):
        # h: (C, L) f32; w: (C, K*C) compute_dtype; b: (C, 1) f32.
        taps = []
        for j in range(K):                      # unrolled: K is tiny & static
            s = (K - 1 - j) * dilation          # causal right-shift of tap j
            if s == 0:
                taps.append(h)
            else:
                rolled = pltpu.roll(h, shift=s, axis=1)      # XLU lane rotate
                # Per-batch causal mask: lanes with (t mod T) < s have no
                # history inside their own sequence -> contribute zero.
                taps.append(jnp.where(col >= s, rolled, 0.0))
        stacked = jnp.concatenate(taps, axis=0).astype(compute_dtype)  # (K*C,L)
        y = jnp.dot(w, stacked, preferred_element_type=jnp.float32)    # (C, L)
        return y + b                            # (C,1) bias broadcasts on lanes

    def kernel(x_ref, w_ref, b_ref, o_ref):
        x = x_ref[...].astype(jnp.float32)                      # (C, L)
        # Hoisted once, reused by both convs.
        col = lax.broadcasted_iota(jnp.int32, (C, L), 1) % T

        h = causal_conv(x, col, w_ref[0], b_ref[:, 0:1])        # conv1 (+BN1)
        h = jnp.maximum(h, 0.0)                                 # relu
        # dropout1d: identity in eval mode
        h = causal_conv(h, col, w_ref[1], b_ref[:, 1:2])        # conv2 (+BN2)
        h = jnp.maximum(h, 0.0)                                 # relu
        # dropout1d: identity in eval mode
        o_ref[...] = (x * jax.nn.sigmoid(h)).astype(o_ref.dtype)

    return kernel


def _fold_bn_into_conv(w_koi, b, g, be, m, v):
    """Fold eval-mode BatchNorm into the conv weights/bias.

    w_koi: (K, C_out, C_in); b/g/be/m/v: (C_out, 1).
    Returns w2d (C_out, K*C_in) matching the in-kernel tap stacking, and the
    folded bias (C_out, 1):  w' = w * g*rsqrt(v+eps);  b' = (b-m)*scale + be.
    """
    scale = g * lax.rsqrt(v + BN_EPS)                            # (C, 1)
    w2d = jnp.transpose(w_koi, (1, 0, 2)).reshape(w_koi.shape[1], -1)
    return w2d * scale, (b - m) * scale + be


def _pick_batch_block(B, T, target_lanes=512):
    """Batches per grid step: aim for >=512 lanes but keep >=2 grid steps."""
    bb = max(1, min(B, target_lanes // max(T, 1)))
    if B >= 2:
        bb = max(1, min(bb, B // 2))   # v7x has 2 TCs: keep >= 2 parallel steps
    while B % bb:
        bb -= 1
    return bb


def temporal_aware_block(x, params, *, kernel_size, dilation,
                         compute_dtype=jnp.bfloat16):
    """x: (B, C, T) float32.  params: raw conv + BatchNorm parameters."""
    B, C, T = x.shape
    K = kernel_size

    # Fold BN (eval mode) into conv params; pack both layers together.
    w1, b1 = _fold_bn_into_conv(params["w1"], params["b1"], params["g1"],
                                params["be1"], params["m1"], params["v1"])
    w2, b2 = _fold_bn_into_conv(params["w2"], params["b2"], params["g2"],
                                params["be2"], params["m2"], params["v2"])
    w_pack = jnp.stack([w1, w2], axis=0).astype(compute_dtype)   # (2, C, K*C)
    b_pack = jnp.concatenate([b1, b2], axis=1)                   # (C, 2) f32

    # Lane-dense layout: channels on sublanes, (batch, time) on lanes.
    x2d = jnp.transpose(x, (1, 0, 2)).reshape(C, B * T)

    BB = _pick_batch_block(B, T)
    L = BB * T
    kernel = _make_kernel(C, T, L, K, dilation, compute_dtype)

    out2d = pl.pallas_call(
        kernel,
        out_shape=jax.ShapeDtypeStruct((C, B * T), x.dtype),
        grid_spec=pltpu.PrefetchScalarGridSpec(
            num_scalar_prefetch=0,
            grid=(B // BB,),
            in_specs=[
                pl.BlockSpec((C, L), lambda g: (0, g)),            # x block
                pl.BlockSpec((2, C, K * C), lambda g: (0, 0, 0)),  # weights
                pl.BlockSpec((C, 2), lambda g: (0, 0)),            # biases
            ],
            out_specs=pl.BlockSpec((C, L), lambda g: (0, g)),
        ),
        compiler_params=pltpu.CompilerParams(
            dimension_semantics=("parallel",)),
    )(x2d, w_pack, b_pack)

    return jnp.transpose(out2d.reshape(C, B, T), (1, 0, 2))


def reference_forward(x, params, *, kernel_size, dilation):
    """Pure-JAX reference (lax.conv_general_dilated) for correctness check."""
    pad = (kernel_size - 1) * dilation

    def causal_conv(inp, w_koi, bias):
        # w stored as (K, O, I) -> conv rhs (O, I, K)
        w = jnp.transpose(w_koi, (1, 2, 0))
        y = lax.conv_general_dilated(
            inp, w,
            window_strides=(1,),
            padding=[(pad, 0)],
            rhs_dilation=(dilation,),
            dimension_numbers=("NCH", "OIH", "NCH"),
        )
        return y + bias[None, :, :]

    def bn(y, g, be, m, v):
        return (y - m[None]) * lax.rsqrt(v[None] + BN_EPS) * g[None] + be[None]

    h = jax.nn.relu(bn(causal_conv(x, params["w1"], params["b1"]),
                       params["g1"], params["be1"], params["m1"], params["v1"]))
    h = jax.nn.relu(bn(causal_conv(h, params["w2"], params["b2"]),
                       params["g2"], params["be2"], params["m2"], params["v2"]))
    return x * jax.nn.sigmoid(h)


def make_params(key, C, K):
    ks = jax.random.split(key, 8)
    scale = 1.0 / (C * K) ** 0.5  # PyTorch-ish uniform fan-in scale
    p = {
        "w1": jax.random.uniform(ks[0], (K, C, C), jnp.float32, -scale, scale),
        "b1": jax.random.uniform(ks[1], (C, 1), jnp.float32, -scale, scale),
        "w2": jax.random.uniform(ks[2], (K, C, C), jnp.float32, -scale, scale),
        "b2": jax.random.uniform(ks[3], (C, 1), jnp.float32, -scale, scale),
        # BatchNorm (eval mode): deterministic non-trivial affine + running stats
        "g1": 1.0 + 0.1 * jax.random.normal(ks[4], (C, 1), jnp.float32),
        "be1": 0.1 * jax.random.normal(ks[5], (C, 1), jnp.float32),
        "m1": 0.05 * jax.random.normal(ks[6], (C, 1), jnp.float32),
        "v1": 1.0 + 0.1 * jax.random.uniform(ks[7], (C, 1), jnp.float32),
    }
    ks2 = jax.random.split(ks[7], 4)
    p["g2"] = 1.0 + 0.1 * jax.random.normal(ks2[0], (C, 1), jnp.float32)
    p["be2"] = 0.1 * jax.random.normal(ks2[1], (C, 1), jnp.float32)
    p["m2"] = 0.05 * jax.random.normal(ks2[2], (C, 1), jnp.float32)
    p["v2"] = 1.0 + 0.1 * jax.random.uniform(ks2[3], (C, 1), jnp.float32)
    return p


if __name__ == "__main__":
    # Shapes consistent with Temporal_Aware_Block(i=2, nb_filters=32,
    # kernel_size=3, dropout=0.1) on input (B=2, C=32, T=128).
    B, C, T = 2, 32, 128
    kernel_size, dilation = 3, 2

    key = jax.random.PRNGKey(0)
    kx, kp = jax.random.split(key)
    x = jax.random.normal(kx, (B, C, T), jnp.float32)
    params = make_params(kp, C, kernel_size)

    ref = jax.block_until_ready(
        reference_forward(x, params, kernel_size=kernel_size, dilation=dilation))

    # Full-f32 MXU-operand path: tight check of the structural transformations
    # (BN fold, tap stacking, roll+mask, lane-dense layout).
    out_f32 = jax.block_until_ready(
        temporal_aware_block(x, params, kernel_size=kernel_size,
                             dilation=dilation, compute_dtype=jnp.float32))
    assert out_f32.shape == (B, C, T)
    assert jnp.allclose(out_f32, ref, atol=1e-4, rtol=1e-4), "f32 path mismatch"

    # bf16 MXU-operand path (v6e/v7x fast path); accumulation and all
    # elementwise math remain f32, so only a looser tolerance is needed.
    out_bf16 = jax.block_until_ready(
        temporal_aware_block(x, params, kernel_size=kernel_size,
                             dilation=dilation, compute_dtype=jnp.bfloat16))
    assert out_bf16.shape == (B, C, T)
    assert jnp.allclose(out_bf16, ref, atol=2e-2, rtol=2e-2), "bf16 path mismatch"

    print("KERNEL_OK")
</pallas_src>

<mosaic_0001>
module attributes {stable_mosaic.version = 11 : i64} {
  func.func @kernel(%arg0: i32, %arg1: memref<32x128xf32, #tpu.memory_space<vmem>>, %arg2: memref<2x32x96xf32, #tpu.memory_space<vmem>>, %arg3: memref<32x2xf32, #tpu.memory_space<vmem>>, %arg4: memref<32x128xf32, #tpu.memory_space<vmem>>) attributes {dimension_semantics = [#tpu.dimension_semantics<parallel>], iteration_bounds = array<i64: 2>, scalar_prefetch = 0 : i64, scratch_operands = 0 : i64, tpu.core_type = #tpu.core_type<tc>, window_params = [{transform_indices = @transform_0, window_bounds = array<i64: 32, 128>}, {pipeline_mode = #tpu.pipeline_mode<synchronous>, transform_indices = @transform_1, window_bounds = array<i64: 2, 32, 96>}, {pipeline_mode = #tpu.pipeline_mode<synchronous>, transform_indices = @transform_2, window_bounds = array<i64: 32, 2>}, {transform_indices = @transform_3, window_bounds = array<i64: 32, 128>}]} {
    %c0 = arith.constant 0 : index
    %c0_0 = arith.constant 0 : index
    %0 = vector.load %arg1[%c0, %c0_0] : memref<32x128xf32, #tpu.memory_space<vmem>>, vector<32x128xf32>
    %1 = tpu.iota {dimensions = array<i32: 1>} : vector<32x128xi32>
    %c128_i32 = arith.constant 128 : i32
    %c0_i32 = arith.constant 0 : i32
    %2 = arith.cmpi eq, %c128_i32, %c0_i32 : i32
    %c1_i32 = arith.constant 1 : i32
    %3 = arith.select %2, %c1_i32, %c128_i32 : i32
    %4 = vector.broadcast %3 : i32 to vector<32x128xi32>
    %5 = arith.remsi %1, %4 : vector<32x128xi32>
    %c0_i32_1 = arith.constant 0 : i32
    %6 = vector.broadcast %c0_i32_1 : i32 to vector<32x128xi32>
    %7 = arith.cmpi ne, %5, %6 : vector<32x128xi32>
    %c0_i32_2 = arith.constant 0 : i32
    %8 = vector.broadcast %c0_i32_2 : i32 to vector<32x128xi32>
    %9 = arith.cmpi slt, %5, %8 : vector<32x128xi32>
    %c0_i32_3 = arith.constant 0 : i32
    %10 = arith.cmpi slt, %3, %c0_i32_3 : i32
    %11 = vector.broadcast %10 : i1 to vector<32x128xi1>
    %12 = vector.broadcast %11 : vector<32x128xi1> to vector<32x128xi1>
    %13 = arith.xori %9, %12 : vector<32x128xi1>
    %14 = arith.andi %13, %7 : vector<32x128xi1>
    %15 = vector.broadcast %3 : i32 to vector<32x128xi32>
    %16 = arith.addi %5, %15 : vector<32x128xi32>
    %17 = arith.select %14, %16, %5 : vector<32x128xi1>, vector<32x128xi32>
    %c0_4 = arith.constant 0 : index
    %c0_5 = arith.constant 0 : index
    %c0_6 = arith.constant 0 : index
    %18 = vector.load %arg2[%c0_4, %c0_5, %c0_6] : memref<2x32x96xf32, #tpu.memory_space<vmem>>, vector<1x32x96xf32>
    %19 = vector.shape_cast %18 : vector<1x32x96xf32> to vector<32x96xf32>
    %c0_7 = arith.constant 0 : index
    %c0_8 = arith.constant 0 : index
    %20 = vector.load %arg3[%c0_7, %c0_8] : memref<32x2xf32, #tpu.memory_space<vmem>>, vector<32x1xf32>
    %c4_i32 = arith.constant 4 : i32
    %21 = tpu.dynamic_rotate %0 by %c4_i32 dim 1 : vector<32x128xf32>, i32 -> vector<32x128xf32>
    %c4_i32_9 = arith.constant 4 : i32
    %22 = vector.broadcast %c4_i32_9 : i32 to vector<32x128xi32>
    %23 = arith.cmpi sge, %17, %22 : vector<32x128xi32>
    %cst = arith.constant 0.000000e+00 : f32
    %24 = vector.broadcast %cst : f32 to vector<32x128xf32>
    %25 = arith.select %23, %21, %24 : vector<32x128xi1>, vector<32x128xf32>
    %c2_i32 = arith.constant 2 : i32
    %26 = tpu.dynamic_rotate %0 by %c2_i32 dim 1 : vector<32x128xf32>, i32 -> vector<32x128xf32>
    %c2_i32_10 = arith.constant 2 : i32
    %27 = vector.broadcast %c2_i32_10 : i32 to vector<32x128xi32>
    %28 = arith.cmpi sge, %17, %27 : vector<32x128xi32>
    %cst_11 = arith.constant 0.000000e+00 : f32
    %29 = vector.broadcast %cst_11 : f32 to vector<32x128xf32>
    %30 = arith.select %28, %26, %29 : vector<32x128xi1>, vector<32x128xf32>
    %31 = tpu.concatenate %25, %30, %0 in 0 : vector<32x128xf32>, vector<32x128xf32>, vector<32x128xf32> -> vector<96x128xf32>
    %cst_12 = arith.constant dense<0.000000e+00> : vector<32x128xf32>
    %32 = tpu.matmul %19, %31, %cst_12 {dimension_numbers = #tpu.dot_dimension_numbers<[1], [0], [0], [1], [0, 0, 1, 1], [], []>} : vector<32x96xf32>, vector<96x128xf32>, vector<32x128xf32> -> vector<32x128xf32>
    %33 = vector.broadcast %20 : vector<32x1xf32> to vector<32x128xf32>
    %34 = arith.addf %32, %33 : vector<32x128xf32>
    %cst_13 = arith.constant 0.000000e+00 : f32
    %35 = vector.broadcast %cst_13 : f32 to vector<32x128xf32>
    %36 = arith.maximumf %34, %35 : vector<32x128xf32>
    %c1 = arith.constant 1 : index
    %c0_14 = arith.constant 0 : index
    %c0_15 = arith.constant 0 : index
    %37 = vector.load %arg2[%c1, %c0_14, %c0_15] : memref<2x32x96xf32, #tpu.memory_space<vmem>>, vector<1x32x96xf32>
    %38 = vector.shape_cast %37 : vector<1x32x96xf32> to vector<32x96xf32>
    %c0_16 = arith.constant 0 : index
    %c1_17 = arith.constant 1 : index
    %39 = vector.load %arg3[%c0_16, %c1_17] : memref<32x2xf32, #tpu.memory_space<vmem>>, vector<32x1xf32>
    %c4_i32_18 = arith.constant 4 : i32
    %40 = tpu.dynamic_rotate %36 by %c4_i32_18 dim 1 : vector<32x128xf32>, i32 -> vector<32x128xf32>
    %c4_i32_19 = arith.constant 4 : i32
    %41 = vector.broadcast %c4_i32_19 : i32 to vector<32x128xi32>
    %42 = arith.cmpi sge, %17, %41 : vector<32x128xi32>
    %cst_20 = arith.constant 0.000000e+00 : f32
    %43 = vector.broadcast %cst_20 : f32 to vector<32x128xf32>
    %44 = arith.select %42, %40, %43 : vector<32x128xi1>, vector<32x128xf32>
    %c2_i32_21 = arith.constant 2 : i32
    %45 = tpu.dynamic_rotate %36 by %c2_i32_21 dim 1 : vector<32x128xf32>, i32 -> vector<32x128xf32>
    %c2_i32_22 = arith.constant 2 : i32
    %46 = vector.broadcast %c2_i32_22 : i32 to vector<32x128xi32>
    %47 = arith.cmpi sge, %17, %46 : vector<32x128xi32>
    %cst_23 = arith.constant 0.000000e+00 : f32
    %48 = vector.broadcast %cst_23 : f32 to vector<32x128xf32>
    %49 = arith.select %47, %45, %48 : vector<32x128xi1>, vector<32x128xf32>
    %50 = tpu.concatenate %44, %49, %36 in 0 : vector<32x128xf32>, vector<32x128xf32>, vector<32x128xf32> -> vector<96x128xf32>
    %cst_24 = arith.constant dense<0.000000e+00> : vector<32x128xf32>
    %51 = tpu.matmul %38, %50, %cst_24 {dimension_numbers = #tpu.dot_dimension_numbers<[1], [0], [0], [1], [0, 0, 1, 1], [], []>} : vector<32x96xf32>, vector<96x128xf32>, vector<32x128xf32> -> vector<32x128xf32>
    %52 = vector.broadcast %39 : vector<32x1xf32> to vector<32x128xf32>
    %53 = arith.addf %51, %52 : vector<32x128xf32>
    %cst_25 = arith.constant 0.000000e+00 : f32
    %54 = vector.broadcast %cst_25 : f32 to vector<32x128xf32>
    %55 = arith.maximumf %53, %54 : vector<32x128xf32>
    %56 = arith.negf %55 : vector<32x128xf32>
    %57 = math.exp %56 : vector<32x128xf32>
    %cst_26 = arith.constant 1.000000e+00 : f32
    %58 = vector.broadcast %cst_26 : f32 to vector<32x128xf32>
    %59 = arith.addf %58, %57 : vector<32x128xf32>
    %60 = arith.divf %58, %59 : vector<32x128xf32>
    %61 = arith.mulf %0, %60 : vector<32x128xf32>
    %c0_27 = arith.constant 0 : index
    %c0_28 = arith.constant 0 : index
    %62 = vector.load %arg4[%c0_27, %c0_28] : memref<32x128xf32, #tpu.memory_space<vmem>>, vector<32x128xf32>
    tpu.vector_store %arg4[%c0_27, %c0_28], %61 {strides = array<i32>} : memref<32x128xf32, #tpu.memory_space<vmem>>, vector<32x128xf32>,
    return
  }
  func.func @transform_0(%arg0: i32) -> (i32, i32) {
    %c0_i32 = arith.constant 0 : i32
    %c0_i32_0 = arith.constant 0 : i32
    return %c0_i32, %arg0 : i32, i32
  }
  func.func @transform_1(%arg0: i32) -> (i32, i32, i32) {
    %c0_i32 = arith.constant 0 : i32
    %c0_i32_0 = arith.constant 0 : i32
    %c0_i32_1 = arith.constant 0 : i32
    %c0_i32_2 = arith.constant 0 : i32
    return %c0_i32, %c0_i32_0, %c0_i32_1 : i32, i32, i32
  }
  func.func @transform_2(%arg0: i32) -> (i32, i32) {
    %c0_i32 = arith.constant 0 : i32
    %c0_i32_0 = arith.constant 0 : i32
    %c0_i32_1 = arith.constant 0 : i32
    return %c0_i32, %c0_i32_0 : i32, i32
  }
  func.func @transform_3(%arg0: i32) -> (i32, i32) {
    %c0_i32 = arith.constant 0 : i32
    %c0_i32_0 = arith.constant 0 : i32
    return %c0_i32, %arg0 : i32, i32
  }
}

</mosaic_0001>

<llo_original>
// kernel: tpu_custom_call.1
$region0: #{tpu_custom_call.1}
  #allocation0 [shape = 'u32[]', space=smem, size = 0x4, offset = 0x4, fixed_abs, tag = 'smem constant byte address 0x4 - core index']
  #allocation1 [shape = 'u32[72,128]{1,0:T(1,128)}', space=vmem, size = 0x9000, scoped, tag = 'internal scratch']
  %s0 = inlined_call_operand.hbm [shape: f32[32,256], index: 0, kind: input, shape index: {}]
  %s1 = inlined_call_operand.hbm [shape: f32[2,32,96], index: 1, kind: input, shape index: {}]
  %s2 = inlined_call_operand.vmem [shape: f32[32,2], index: 2, kind: input, shape index: {}]
  %s3 = inlined_call_operand.hbm [shape: f32[32,256], index: 3, kind: output, shape index: {}]
  %s4 = sld [smem:[#allocation0]]
  $region53: #{tpu_custom_call.1} parent=0
    _
  %s6 = ssub.s32 1, %s4
  %s7 = scalar_select 0, %s6, %s4
  $region1: #{tpu_custom_call.1} parent=0
    #allocation2 [shape = 'u8[32768]{0}', space=vmem, size = 0x8000, scoped, tag = 'input window, operand 0']
    #allocation3 [shape = 's32[2]{0}', space=sflag, size = 0x8, scoped, tag = 'scoped memory for tpu_custom_call.1']
    #allocation4 [shape = 's32[2]{0}', space=sflag, size = 0x8, scoped, tag = 'scoped memory for tpu_custom_call.1']
    #allocation5 [shape = 'u8[32768]{0}', space=vmem, size = 0x8000, scoped, tag = 'input window, operand 1, single buffered']
    #allocation6 [shape = 's32[1]{0}', space=sflag, size = 0x4, scoped, tag = 'scoped memory for tpu_custom_call.1']
    #allocation7 [shape = 'u8[32768]{0}', space=vmem, size = 0x8000, scoped, tag = 'output window, operand 0']
    %8 = vsyncpa [#allocation3], 0
    %s9 = scalar_lea.sflag [#allocation3], 1
    %10 = vsyncpa %s9, 0
    %11 = vsyncpa [#allocation6], 0
    %12 = vsyncpa [#allocation4], 0
    %s13 = scalar_lea.sflag [#allocation4], 1
    %14 = vsyncpa %s13, 0
    loop: start=0, step=1, limit=4
    $region2: #{tpu_custom_call.1} parent=1 // loop_pre_header
      _
    $region3: #{tpu_custom_call.1} parent=1 // loop_header
      %s16 = sphi 0, %s20
      %p17 = scmp.ge.s32.totalorder %s16, 4
      %s26 = sphi 0, %s28
      %s29 = sphi 0, %s26
      %s30 = sphi 0, %s29
      %s46 = sphi 0, %s30
      %s50 = sphi 0, %s50
      %s52 = sphi 0, %s50
      %s53 = sphi 0, %s52
      %s67 = sphi 0, %s53
      %s71 = sphi 0, %s71
      %s73 = sphi 0, %s71
      %s74 = sphi 0, %s73
      %s88 = sphi 0, %s74
      %s94 = sphi 0, %s96
      %s97 = sphi 0, %s94
      %s98 = sphi 0, %s97
      %s114 = sphi 0, %s98
    $region4: #{tpu_custom_call.1} parent=1 // loop_header_branch
      %19 = sbr.rel (%p17) target = $region8
    $region5: #{tpu_custom_call.1} parent=1 // loop_body
      %s21 = ssub.s32 %s16, 1
      %s22 = ssub.s32 %s16, 2
      %s23 = sadd.s32 %s16, 1
      %s24 = ssub.s32 %s16, %s23
      %p25 = scmp.eq.s32.totalorder %s24, 0
      %s27 = sadd.s32 %s26, 1
      %s28 = scalar_select %p25, %s26, %s27
      %p31 = pneg %p25
      %p32 = scmp.eq.s32.totalorder %s16, 1
      %p33 = por %p31, %p32
      %p34 = scmp.ne.s32.totalorder %s26, %s29
      %p35 = scmp.eq.s32.totalorder %s16, 0
      %p36 = por %p34, %p35
      %p37 = scmp.ne.s32.totalorder %s26, %s29
      %p38 = scmp.eq.s32.totalorder %s21, 1
      %p39 = por %p37, %p38
      %p40 = scmp.ne.s32.totalorder %s29, %s30
      %p41 = scmp.eq.s32.totalorder %s21, 0
      %p42 = por %p40, %p41
      %p43 = scmp.ne.s32.totalorder %s29, %s30
      %p44 = scmp.eq.s32.totalorder %s22, 1
      %p45 = por %p43, %p44
      %p47 = scmp.ne.s32.totalorder %s30, %s46
      %p48 = scmp.eq.s32.totalorder %s22, 0
      %p49 = por %p47, %p48
      %s51 = sadd.s32 %s50, 1
      %p54 = scmp.eq.s32.totalorder %s16, 1
      %p55 = scmp.ne.s32.totalorder %s50, %s52
      %p56 = scmp.eq.s32.totalorder %s16, 0
      %p57 = por %p55, %p56
      %p58 = scmp.ne.s32.totalorder %s50, %s52
      %p59 = scmp.eq.s32.totalorder %s21, 1
      %p60 = por %p58, %p59
      %p61 = scmp.ne.s32.totalorder %s52, %s53
      %p62 = scmp.eq.s32.totalorder %s21, 0
      %p63 = por %p61, %p62
      %p64 = scmp.ne.s32.totalorder %s52, %s53
      %p65 = scmp.eq.s32.totalorder %s22, 1
      %p66 = por %p64, %p65
      %p68 = scmp.ne.s32.totalorder %s53, %s67
      %p69 = scmp.eq.s32.totalorder %s22, 0
      %p70 = por %p68, %p69
      %s72 = sadd.s32 %s71, 1
      %p75 = scmp.eq.s32.totalorder %s16, 1
      %p76 = scmp.ne.s32.totalorder %s71, %s73
      %p77 = scmp.eq.s32.totalorder %s16, 0
      %p78 = por %p76, %p77
      %p79 = scmp.ne.s32.totalorder %s71, %s73
      %p80 = scmp.eq.s32.totalorder %s21, 1
      %p81 = por %p79, %p80
      %p82 = scmp.ne.s32.totalorder %s73, %s74
      %p83 = scmp.eq.s32.totalorder %s21, 0
      %p84 = por %p82, %p83
      %p85 = scmp.ne.s32.totalorder %s73, %s74
      %p86 = scmp.eq.s32.totalorder %s22, 1
      %p87 = por %p85, %p86
      %p89 = scmp.ne.s32.totalorder %s74, %s88
      %p90 = scmp.eq.s32.totalorder %s22, 0
      %p91 = por %p89, %p90
      %s92 = ssub.s32 %s16, %s23
      %p93 = scmp.eq.s32.totalorder %s92, 0
      %s95 = sadd.s32 %s94, 1
      %s96 = scalar_select %p93, %s94, %s95
      %p99 = pneg %p93
      %p100 = scmp.eq.s32.totalorder %s16, 1
      %p101 = por %p99, %p100
      %p102 = scmp.ne.s32.totalorder %s94, %s97
      %p103 = scmp.eq.s32.totalorder %s16, 0
      %p104 = por %p102, %p103
      %p105 = scmp.ne.s32.totalorder %s94, %s97
      %p106 = scmp.eq.s32.totalorder %s21, 1
      %p107 = por %p105, %p106
      %p108 = scmp.ne.s32.totalorder %s97, %s98
      %p109 = scmp.eq.s32.totalorder %s21, 0
      %p110 = por %p108, %p109
      %p111 = scmp.ne.s32.totalorder %s97, %s98
      %p112 = scmp.eq.s32.totalorder %s22, 1
      %p113 = por %p111, %p112
      %p115 = scmp.ne.s32.totalorder %s98, %s114
      %p116 = scmp.eq.s32.totalorder %s22, 0
      %p117 = por %p115, %p116
      %p118 = scmp.le.s32.totalorder 1, %s16
      %p119 = scmp.lt.s32.totalorder %s16, 3
      %p120 = pnand %p118, %p119
      %p121 = pneg %p120
      // Predicated region
      $region9: #{tpu_custom_call.1} parent=5 // pred_check
        _
      $region10: #{tpu_custom_call.1} parent=5 // pred_check_branch
        %123 = sbr.rel (%p120) target = $region12
      $region11: #{tpu_custom_call.1} parent=5 // pred_region
        %s124 = ssub.s32 %s16, 1
        // Predicated region
        $region13: #{tpu_custom_call.1} parent=11 // pred_check
          %p125 = pneg %p63
        $region14: #{tpu_custom_call.1} parent=11 // pred_check_branch
          %127 = sbr.rel (%p125) target = $region16
        $region15: #{tpu_custom_call.1} parent=11 // pred_region
          %129 = vsyncadd [#allocation6], 0
          %s130 = sshll.u32 %s1, 4
          %s131 = int_to_ptr.hbm [resolvable:$true] %s130
          %s132 = sshll.u32 [#allocation5], 4
          %s133 = int_to_ptr.vmem [resolvable:$true] %s132
          %138 = dma.hbm_to_vmem [thread:$0]  %s131, 1024, %s133, [#allocation6], 128, 128, 8
        $region16: #{tpu_custom_call.1} parent=11 // pred_fallthru
          _
        // Predicated region
        $region17: #{tpu_custom_call.1} parent=11 // pred_check
          %p139 = pneg %p84
        $region18: #{tpu_custom_call.1} parent=11 // pred_check_branch
          %141 = sbr.rel (%p139) target = $region20
        $region19: #{tpu_custom_call.1} parent=11 // pred_region
          _
        $region20: #{tpu_custom_call.1} parent=11 // pred_fallthru
          _
      $region12: #{tpu_custom_call.1} parent=5 // pred_fallthru
        _
      %p142 = scmp.lt.s32.totalorder %s16, 2
      // Predicated region
      $region21: #{tpu_custom_call.1} parent=5 // pred_check
        %p143 = pneg %p142
      $region22: #{tpu_custom_call.1} parent=5 // pred_check_branch
        %145 = sbr.rel (%p143) target = $region24
      $region23: #{tpu_custom_call.1} parent=5 // pred_region
        // Predicated region
        $region25: #{tpu_custom_call.1} parent=23 // pred_check
          %p146 = pneg %p36
        $region26: #{tpu_custom_call.1} parent=23 // pred_check_branch
          %148 = sbr.rel (%p146) target = $region28
        $region27: #{tpu_custom_call.1} parent=23 // pred_region
          %s149 = sand.u32 %s26, 1
          %s150 = scalar_lea.sflag [#allocation3], %s149
          %s151 = sand.u32 %s26, 1
          %s152 = smul.addr %s151, 32
          %s153 = scalar_lea.vmem [#allocation2], %s152
          %155 = vsyncadd %s150, 0
          %s156 = smul.addr %s16, 8
          %s157 = scalar_lea.hbm %s0, %s156
          %s158 = sshll.u32 %s157, 4
          %s159 = int_to_ptr.hbm [resolvable:$true] %s158
          %s160 = sshll.u32 %s153, 4
          %s161 = int_to_ptr.vmem [resolvable:$true] %s160
          %166 = dma.hbm_to_vmem [thread:$0]  %s159, 512, %s161, %s150, 256, 128, 8
        $region28: #{tpu_custom_call.1} parent=23 // pred_fallthru
          _
      $region24: #{tpu_custom_call.1} parent=5 // pred_fallthru
        _
      %p167 = scmp.le.s32.totalorder 1, %s16
      %p168 = scmp.lt.s32.totalorder %s16, 3
      %p169 = pnand %p167, %p168
      %p170 = pneg %p169
      // Predicated region
      $region29: #{tpu_custom_call.1} parent=5 // pred_check
        _
      $region30: #{tpu_custom_call.1} parent=5 // pred_check_branch
        %172 = sbr.rel (%p169) target = $region32
      $region31: #{tpu_custom_call.1} parent=5 // pred_region
        %s173 = ssub.s32 %s16, 1
        %s174 = sand.u32 %s29, 1
        %s175 = scalar_lea.sflag [#allocation3], %s174
        %s176 = sand.u32 %s29, 1
        %s177 = smul.addr %s176, 32
        %s178 = scalar_lea.vmem [#allocation2], %s177
        // Predicated region
        $region33: #{tpu_custom_call.1} parent=31 // pred_check
          %p179 = pneg %p42
        $region34: #{tpu_custom_call.1} parent=31 // pred_check_branch
          %181 = sbr.rel (%p179) target = $region36
        $region35: #{tpu_custom_call.1} parent=31 // pred_region
          %183 = dma.done %s175, 512
        $region36: #{tpu_custom_call.1} parent=31 // pred_fallthru
          _
        // Predicated region
        $region37: #{tpu_custom_call.1} parent=31 // pred_check
          %p184 = pneg %p63
        $region38: #{tpu_custom_call.1} parent=31 // pred_check_branch
          %186 = sbr.rel (%p184) target = $region40
        $region39: #{tpu_custom_call.1} parent=31 // pred_region
          %188 = dma.done [#allocation6], 1024
        $region40: #{tpu_custom_call.1} parent=31 // pred_fallthru
          _
        %s189 = sand.u32 %s29, 1
        %s190 = scalar_lea.sflag [#allocation3], %s189
        %s191 = sand.u32 %s29, 1
        %s192 = smul.addr %s191, 32
        %s193 = scalar_lea.vmem [#allocation2], %s192
        %p194 = pneg %p42
        %p195 = pneg %p39
        %p196 = pneg %p63
        %p197 = pneg %p60
        %p198 = pneg %p84
        %p199 = pneg %p81
        %p200 = pneg %p110
        %p201 = pneg %p107
        %s202 = sand.u32 %s97, 1
        %s203 = scalar_lea.sflag [#allocation4], %s202
        %s204 = sand.u32 %s97, 1
        %s205 = smul.addr %s204, 32
        %s206 = scalar_lea.vmem [#allocation7], %s205
        %v207 = vld [vmem:[%s178] sm:$0xff]
        %v208 = vld [vmem:[%s178 + $0x8] sm:$0xff]
        %v209 = vld [vmem:[%s178 + $0x10] sm:$0xff]
        %v210 = vld [vmem:[%s178 + $0x18] sm:$0xff]
        %v211 = vlaneseq
        %v212 = vand.u32 %v211, 127
        %vm213 = vcmp.lt.s32.totalorder %v212, 0
        %v214 = vsub.s32 0, %v212
        %v215 = vsel %vm213, %v214, %v212
        %v216 = vshrl.u32 %v215, 7
        %v217 = vand.u32 %v215, 127
        %v218 = vsub.s32 0, %v217
        %v219 = vsel %vm213, %v218, %v217
        %vm220 = vcmp.ne.s32.totalorder %v219, 0
        %vm221 = vcmp.lt.s32.totalorder %v219, 0
        %vm222 = vmand %vm221, %vm220
        %v223 = vadd.s32 %v219, 128
        %v224 = vsel %vm222, %v223, %v219
        %v225 = vld [vmem:[#allocation5] sm:$0xff]
        %v226 = vld [vmem:[#allocation5 + $0x8] sm:$0xff]
        %v227 = vld [vmem:[#allocation5 + $0x10] sm:$0xff]
        %v228 = vld [vmem:[#allocation5 + $0x18] sm:$0xff]
        %v229 = vld [vmem:[%s2] sm:$0xff]
        %v230 = vld [vmem:[%s2 + $0x8] sm:$0xff]
        %v231 = vld [vmem:[%s2 + $0x10] sm:$0xff]
        %v232 = vld [vmem:[%s2 + $0x18] sm:$0xff]
        %233 = vrot.lane.b32.xlu0 %v207, 4
        %v234 = vpop.permute.xlu0 %233
        %235 = vrot.lane.b32.xlu0 %v208, 4
        %v236 = vpop.permute.xlu0 %235
        %237 = vrot.lane.b32.xlu0 %v209, 4
        %v238 = vpop.permute.xlu0 %237
        %239 = vrot.lane.b32.xlu0 %v210, 4
        %v240 = vpop.permute.xlu0 %239
        %vm241 = vcmp.ge.s32.totalorder %v224, 4
        %v242 = vsel %vm241, %v234, 0.0
        %v243 = vsel %vm241, %v236, 0.0
        %v244 = vsel %vm241, %v238, 0.0
        %v245 = vsel %vm241, %v240, 0.0
        %246 = vrot.lane.b32.xlu0 %v207, 2
        %v247 = vpop.permute.xlu0 %246
        %248 = vrot.lane.b32.xlu0 %v208, 2
        %v249 = vpop.permute.xlu0 %248
        %250 = vrot.lane.b32.xlu0 %v209, 2
        %v251 = vpop.permute.xlu0 %250
        %252 = vrot.lane.b32.xlu0 %v210, 2
        %v253 = vpop.permute.xlu0 %252
        %vm254 = vcmp.ge.s32.totalorder %v224, 2
        %v255 = vsel %vm254, %v247, 0.0
        %v256 = vsel %vm254, %v249, 0.0
        %v257 = vsel %vm254, %v251, 0.0
        %v258 = vsel %vm254, %v253, 0.0
        %260 = vset.pattern.permute.xlu0 0
        %261 = vperm.xlu0 %260, %v229
        %v262 = vpop.permute.xlu0 %261
        %265 = vset.pattern.permute.xlu0 0
        %266 = vperm.xlu0 %265, %v230
        %v267 = vpop.permute.xlu0 %266
        %270 = vset.pattern.permute.xlu0 0
        %271 = vperm.xlu0 %270, %v231
        %v272 = vpop.permute.xlu0 %271
        %275 = vset.pattern.permute.xlu0 0
        %276 = vperm.xlu0 %275, %v232
        %v277 = vpop.permute.xlu0 %276
        %vm279 = vcmask 785408
        %v281 = vsel %vm279, %v225, 0
        %v284 = vsel %vm279, %v226, 0
        %v287 = vsel %vm279, %v227, 0
        %v290 = vsel %vm279, %v228, 0
        %292 = vmatpush.msra.mxu0 0.0
        %293 = vmatpush.msra.mxu0 0.0
        %294 = vmatpush.msra.mxu0 0.0
        %295 = vmatpush.msra.mxu0 0.0
        %296 = vmatpush.msra.mxu0 %v210
        %297 = vmatpush.msra.mxu0 %v209
        %298 = vmatpush.msra.mxu0 %v208
        %299 = vmatpush.msra.mxu0 %v207
        %300 = vmatpush.msra.mxu0 %v258
        %301 = vmatpush.msra.mxu0 %v257
        %302 = vmatpush.msra.mxu0 %v256
        %303 = vmatpush.msra.mxu0 %v255
        %304 = vmatpush.msra.mxu0 %v245
        %305 = vmatpush.msra.mxu0 %v244
        %306 = vmatpush.msra.mxu0 %v243
        %307 = vmatpush.msra.mxu0 %v242
        %308 = vmatmul.f32.gmra.mxu0 %v281
        %v309 = vpop.f32.mrf.mxu0
        %v310 = vadd.f32 %v262, %v309
        %311 = vmatmul.f32.gmra.mxu0 %v284
        %v312 = vpop.f32.mrf.mxu0
        %v313 = vadd.f32 %v267, %v312
        %314 = vmatmul.f32.gmra.mxu0 %v287
        %v315 = vpop.f32.mrf.mxu0
        %v316 = vadd.f32 %v272, %v315
        %317 = vmatmul.f32.gmra.mxu0 %v290
        %v318 = vpop.f32.mrf.mxu0
        %v319 = vadd.f32 %v277, %v318
        %320 = vdwg.mxu0
        %v321 = vmax.f32 %v310, 0.0
        %v322 = vmax.f32 %v313, 0.0
        %v323 = vmax.f32 %v316, 0.0
        %v324 = vmax.f32 %v319, 0.0
        %s325 = scalar_lea.vmem [#allocation5], 32
        %v326 = vld [vmem:[%s325] sm:$0xff]
        %v327 = vld [vmem:[%s325 + $0x8] sm:$0xff]
        %v328 = vld [vmem:[%s325 + $0x10] sm:$0xff]
        %v329 = vld [vmem:[%s325 + $0x18] sm:$0xff]
        %330 = vrot.lane.b32.xlu0 %v321, 4
        %v331 = vpop.permute.xlu0 %330
        %332 = vrot.lane.b32.xlu0 %v322, 4
        %v333 = vpop.permute.xlu0 %332
        %334 = vrot.lane.b32.xlu0 %v323, 4
        %v335 = vpop.permute.xlu0 %334
        %336 = vrot.lane.b32.xlu0 %v324, 4
        %v337 = vpop.permute.xlu0 %336
        %v338 = vsel %vm241, %v331, 0.0
        %v339 = vsel %vm241, %v333, 0.0
        %v340 = vsel %vm241, %v335, 0.0
        %v341 = vsel %vm241, %v337, 0.0
        %342 = vrot.lane.b32.xlu0 %v321, 2
        %v343 = vpop.permute.xlu0 %342
        %344 = vrot.lane.b32.xlu0 %v322, 2
        %v345 = vpop.permute.xlu0 %344
        %346 = vrot.lane.b32.xlu0 %v323, 2
        %v347 = vpop.permute.xlu0 %346
        %348 = vrot.lane.b32.xlu0 %v324, 2
        %v349 = vpop.permute.xlu0 %348
        %v350 = vsel %vm254, %v343, 0.0
        %v351 = vsel %vm254, %v345, 0.0
        %v352 = vsel %vm254, %v347, 0.0
        %v353 = vsel %vm254, %v349, 0.0
        %354 = vset.pattern.permute.xlu0 1
        %355 = vperm.xlu0 %354, %v229
        %v356 = vpop.permute.xlu0 %355
        %358 = vset.pattern.permute.xlu0 1
        %359 = vperm.xlu0 %358, %v230
        %v360 = vpop.permute.xlu0 %359
        %362 = vset.pattern.permute.xlu0 1
        %363 = vperm.xlu0 %362, %v231
        %v364 = vpop.permute.xlu0 %363
        %366 = vset.pattern.permute.xlu0 1
        %367 = vperm.xlu0 %366, %v232
        %v368 = vpop.permute.xlu0 %367
        %v371 = vsel %vm279, %v326, 0
        %v374 = vsel %vm279, %v327, 0
        %v377 = vsel %vm279, %v328, 0
        %v380 = vsel %vm279, %v329, 0
        %382 = vmatpush.msra.mxu0 0.0
        %383 = vmatpush.msra.mxu0 0.0
        %384 = vmatpush.msra.mxu0 0.0
        %385 = vmatpush.msra.mxu0 0.0
        %386 = vmatpush.msra.mxu0 %v324
        %387 = vmatpush.msra.mxu0 %v323
        %388 = vmatpush.msra.mxu0 %v322
        %389 = vmatpush.msra.mxu0 %v321
        %390 = vmatpush.msra.mxu0 %v353
        %391 = vmatpush.msra.mxu0 %v352
        %392 = vmatpush.msra.mxu0 %v351
        %393 = vmatpush.msra.mxu0 %v350
        %394 = vmatpush.msra.mxu0 %v341
        %395 = vmatpush.msra.mxu0 %v340
        %396 = vmatpush.msra.mxu0 %v339
        %397 = vmatpush.msra.mxu0 %v338
        %398 = vmatmul.f32.gmra.mxu0 %v371
        %v399 = vpop.f32.mrf.mxu0
        %v400 = vadd.f32 %v356, %v399
        %401 = vmatmul.f32.gmra.mxu0 %v374
        %v402 = vpop.f32.mrf.mxu0
        %v403 = vadd.f32 %v360, %v402
        %404 = vmatmul.f32.gmra.mxu0 %v377
        %v405 = vpop.f32.mrf.mxu0
        %v406 = vadd.f32 %v364, %v405
        %407 = vmatmul.f32.gmra.mxu0 %v380
        %v408 = vpop.f32.mrf.mxu0
        %v409 = vadd.f32 %v368, %v408
        %410 = vdwg.mxu0
        %v411 = vmax.f32 %v400, 0.0
        %v412 = vmax.f32 %v403, 0.0
        %v413 = vmax.f32 %v406, 0.0
        %v414 = vmax.f32 %v409, 0.0
        %v415 = vxor.u32 %v411, 2147483648
        %v416 = vxor.u32 %v412, 2147483648
        %v417 = vxor.u32 %v413, 2147483648
        %v418 = vxor.u32 %v414, 2147483648
        %v419 = vmul.f32 %v415, 1.442695
        %v420 = vpow.pop %v419
        %v421 = vmul.f32 %v416, 1.442695
        %v422 = vpow.pop %v421
        %v423 = vmul.f32 %v417, 1.442695
        %v424 = vpow.pop %v423
        %v425 = vmul.f32 %v418, 1.442695
        %v426 = vpow.pop %v425
        %v427 = vadd.f32 %v420, 1.0
        %v428 = vadd.f32 %v422, 1.0
        %v429 = vadd.f32 %v424, 1.0
        %v430 = vadd.f32 %v426, 1.0
        %v431 = vrcp.pop %v427
        %v432 = vmul.f32 %v427, %v431
        %v433 = vsub.f32 1.0, %v432
        %v434 = vmul.f32 %v431, %v433
        %v435 = vadd.f32 %v431, %v434
        %vm436 = vweird.f32 %v427
        %vm437 = vweird.f32 %v431
        %vm438 = vmor %vm436, %vm437
        %v439 = vsel %vm438, %v431, %v435
        %v440 = vand.u32 2147483647, %v427
        %vm441 = vcmp.eq.f32.partialorder %v440, 8.507059e+37
        %v442 = vand.u32 %v427, 2147483648
        %v443 = vor.u32 1.1754944e-38, %v442
        %v444 = vsel %vm441, %v443, %v439
        %v445 = vmul.f32 1.0, %v444
        %v446 = vrcp.pop %v428
        %v447 = vmul.f32 %v428, %v446
        %v448 = vsub.f32 1.0, %v447
        %v449 = vmul.f32 %v446, %v448
        %v450 = vadd.f32 %v446, %v449
        %vm451 = vweird.f32 %v428
        %vm452 = vweird.f32 %v446
        %vm453 = vmor %vm451, %vm452
        %v454 = vsel %vm453, %v446, %v450
        %v455 = vand.u32 2147483647, %v428
        %vm456 = vcmp.eq.f32.partialorder %v455, 8.507059e+37
        %v457 = vand.u32 %v428, 2147483648
        %v458 = vor.u32 1.1754944e-38, %v457
        %v459 = vsel %vm456, %v458, %v454
        %v460 = vmul.f32 1.0, %v459
        %v461 = vrcp.pop %v429
        %v462 = vmul.f32 %v429, %v461
        %v463 = vsub.f32 1.0, %v462
        %v464 = vmul.f32 %v461, %v463
        %v465 = vadd.f32 %v461, %v464
        %vm466 = vweird.f32 %v429
        %vm467 = vweird.f32 %v461
        %vm468 = vmor %vm466, %vm467
        %v469 = vsel %vm468, %v461, %v465
        %v470 = vand.u32 2147483647, %v429
        %vm471 = vcmp.eq.f32.partialorder %v470, 8.507059e+37
        %v472 = vand.u32 %v429, 2147483648
        %v473 = vor.u32 1.1754944e-38, %v472
        %v474 = vsel %vm471, %v473, %v469
        %v475 = vmul.f32 1.0, %v474
        %v476 = vrcp.pop %v430
        %v477 = vmul.f32 %v430, %v476
        %v478 = vsub.f32 1.0, %v477
        %v479 = vmul.f32 %v476, %v478
        %v480 = vadd.f32 %v476, %v479
        %vm481 = vweird.f32 %v430
        %vm482 = vweird.f32 %v476
        %vm483 = vmor %vm481, %vm482
        %v484 = vsel %vm483, %v476, %v480
        %v485 = vand.u32 2147483647, %v430
        %vm486 = vcmp.eq.f32.partialorder %v485, 8.507059e+37
        %v487 = vand.u32 %v430, 2147483648
        %v488 = vor.u32 1.1754944e-38, %v487
        %v489 = vsel %vm486, %v488, %v484
        %v490 = vmul.f32 1.0, %v489
        %v491 = vmul.f32 %v207, %v445
        %v492 = vmul.f32 %v208, %v460
        %v493 = vmul.f32 %v209, %v475
        %v494 = vmul.f32 %v210, %v490
        %495 = vst [vmem:[%s206] sm:$0xff] %v491
        %496 = vst [vmem:[%s206 + $0x8] sm:$0xff] %v492
        %497 = vst [vmem:[%s206 + $0x10] sm:$0xff] %v493
        %498 = vst [vmem:[%s206 + $0x18] sm:$0xff] %v494
        %s499 = sand.u32 %s97, 1
        %s500 = scalar_lea.sflag [#allocation4], %s499
        %s501 = sand.u32 %s97, 1
        %s502 = smul.addr %s501, 32
        %s503 = scalar_lea.vmem [#allocation7], %s502
        // Predicated region
        $region41: #{tpu_custom_call.1} parent=31 // pred_check
          %p504 = pneg %p107
        $region42: #{tpu_custom_call.1} parent=31 // pred_check_branch
          %506 = sbr.rel (%p504) target = $region44
        $region43: #{tpu_custom_call.1} parent=31 // pred_region
          %508 = vsyncadd %s500, 0
          %s509 = smul.addr %s21, 8
          %s510 = scalar_lea.hbm %s3, %s509
          %s511 = sshll.u32 %s503, 4
          %s512 = int_to_ptr.vmem [resolvable:$true] %s511
          %s513 = sshll.u32 %s510, 4
          %s514 = int_to_ptr.hbm [resolvable:$true] %s513
          %519 = dma.vmem_to_hbm [thread:$0]  %s512, 512, %s514, %s500, 128, 256, 8
        $region44: #{tpu_custom_call.1} parent=31 // pred_fallthru
          _
      $region32: #{tpu_custom_call.1} parent=5 // pred_fallthru
        _
      %p520 = scmp.le.s32.totalorder 2, %s16
      // Predicated region
      $region45: #{tpu_custom_call.1} parent=5 // pred_check
        %p521 = pneg %p520
      $region46: #{tpu_custom_call.1} parent=5 // pred_check_branch
        %523 = sbr.rel (%p521) target = $region48
      $region47: #{tpu_custom_call.1} parent=5 // pred_region
        %s524 = ssub.s32 %s16, 2
        // Predicated region
        $region49: #{tpu_custom_call.1} parent=47 // pred_check
          %p525 = pneg %p113
        $region50: #{tpu_custom_call.1} parent=47 // pred_check_branch
          %527 = sbr.rel (%p525) target = $region52
        $region51: #{tpu_custom_call.1} parent=47 // pred_region
          %s528 = sand.u32 %s98, 1
          %s529 = scalar_lea.sflag [#allocation4], %s528
          %s530 = sand.u32 %s98, 1
          %s531 = smul.addr %s530, 32
          %s532 = scalar_lea.vmem [#allocation7], %s531
          %534 = dma.done %s529, 512
        $region52: #{tpu_custom_call.1} parent=47 // pred_fallthru
          _
      $region48: #{tpu_custom_call.1} parent=5 // pred_fallthru
        _
    $region6: #{tpu_custom_call.1} parent=1 // loop_footer
      %s20 = sadd.s32 1, %s16
    $region7: #{tpu_custom_call.1} parent=1 // loop_footer_branch
      %15 = sbr.rel target = $region3
    $region8: #{tpu_custom_call.1} parent=1 // loop_exit
      _
    %535 = vsyncpa [#allocation3], 1
    %s536 = scalar_lea.sflag [#allocation3], 1
    %537 = vsyncpa %s536, 1
    %538 = vsyncpa [#allocation6], 1
    %539 = vsyncpa [#allocation4], 1
    %s540 = scalar_lea.sflag [#allocation4], 1
    %541 = vsyncpa %s540, 1

</llo_original>
